<compile_context>
chip_gen: v5e
topology: v5e:2x2
jax: 0.10.0
libtpu: 0.0.40
codegen_flags: <defaults>
</compile_context>

<pallas_src>
import math

import jax
import jax.numpy as jnp
from jax.experimental import pallas as pl
from jax.experimental.pallas import tpu as pltpu


def _round_up(x, m):
    return (x + m - 1) // m * m


def _cdiv(a, b):
    return -(-a // b)


def _halve_mult(x, m):
    # Halve x, rounded down to a multiple of m, floored at m.
    return max(m, (x // 2) // m * m)


def _make_kernel(n_nodes, tk, mask_k, stream_precision):
    hi = jax.lax.Precision.HIGHEST

    def kernel(adj_ref, seq_ref, w1_ref, wf1_ref, b1_ref, wf2_ref, b2_ref,
               out_ref, acc_ref):
        """One (row-tile, K-tile) step of the fused GNN forward.

        adj_ref : (TM, TK)  slab of the (gathered) adjacency rows — the
                            dominant, pipelined HBM stream
        seq_ref : (TK, D)   node-feature K-block
        w1_ref  : (D, H)    Aggr_module.fc_1 weight (pre-transposed, no bias)
        wf1_ref : (H, H)    Est_module.fc1 weight (pre-transposed)
        b1_ref  : (1, H)    Est_module.fc1 bias
        wf2_ref : (1, H)    Est_module.fc2 weight (PyTorch [1, H] layout)
        b2_ref  : (1,)      Est_module.fc2 bias (SMEM scalar)
        out_ref : (1, 1, TM) lane-dense point estimates for this row tile
        acc_ref : (TM, D)   f32 accumulator for aggr = adj @ seq
        """
        k = pl.program_id(1)

        @pl.when(k == 0)
        def _init():
            acc_ref[...] = jnp.zeros_like(acc_ref)

        adj_blk = adj_ref[...]
        seq_blk = seq_ref[...]
        if mask_k:
            # Last K block is partial: zero both the OOB adjacency columns and
            # the OOB seq rows so stale VMEM (possibly NaN/Inf) cannot leak
            # into valid rows of the accumulator.
            base = k * tk
            col = jax.lax.broadcasted_iota(jnp.int32, adj_blk.shape, 1) + base
            adj_blk = jnp.where(col < n_nodes, adj_blk, 0)
            row = jax.lax.broadcasted_iota(jnp.int32, seq_blk.shape, 0) + base
            seq_blk = jnp.where(row < n_nodes, seq_blk, 0)

        # aggr += adj_blk @ seq_blk                     (MXU)  [TM,TK] @ [TK,D]
        acc_ref[...] += jnp.dot(adj_blk, seq_blk,
                                preferred_element_type=jnp.float32,
                                precision=stream_precision)

        @pl.when(k == pl.num_programs(1) - 1)
        def _finalize():
            # h1 = relu(aggr @ W1)                      (MXU)  [TM,D] @ [D,H]
            h1 = jnp.maximum(
                jnp.dot(acc_ref[...], w1_ref[...],
                        preferred_element_type=jnp.float32, precision=hi),
                0.0)
            # e1 = relu(h1 @ Wf1 + b1)                  (MXU)  [TM,H] @ [H,H]
            e1 = jnp.maximum(
                jnp.dot(h1, wf1_ref[...],
                        preferred_element_type=jnp.float32, precision=hi)
                + b1_ref[...], 0.0)
            # out = Wf2 @ e1^T + b2  -> (1, TM): lane-dense, so the store is a
            # single unmasked vst row instead of TM masked 1-lane stores.
            row_out = jax.lax.dot_general(
                wf2_ref[...], e1, (((1,), (1,)), ((), ())),
                preferred_element_type=jnp.float32, precision=hi)
            out_ref[...] = (row_out + b2_ref[0])[None]

    return kernel


def gnn_exploitation_forward(seq, adj, params, user_i=None, *,
                             use_bf16=False, _force_tiles=None):
    """seq: [N, D] node features, adj: [N, N] adjacency, user_i: optional 1-D
    int32 row indices.  Returns point estimates [len(user_i), 1] (or [N, 1])."""
    n_nodes, d = seq.shape
    h = params["w1"].shape[1]

    # forward(): embed_c = h_1.index_select(0, user_i).  Row selection commutes
    # with every row-wise op here, so gather the adjacency rows FIRST and only
    # stream / compute O(|user_i| * N) instead of O(N^2).
    adj_rows = adj if user_i is None else jnp.take(adj, user_i, axis=0)
    m = adj_rows.shape[0]

    stream_dtype = jnp.bfloat16 if use_bf16 else jnp.float32
    adj_rows = adj_rows.astype(stream_dtype)
    seq_s = seq.astype(stream_dtype)
    isz = jnp.dtype(stream_dtype).itemsize
    stream_prec = (jax.lax.Precision.DEFAULT if use_bf16
                   else jax.lax.Precision.HIGHEST)

    # ---- generation-aware VMEM budget -------------------------------------
    try:
        vmem_cap = int(pltpu.get_tpu_info().vmem_capacity_bytes)
    except Exception:
        vmem_cap = 64 << 20            # conservative fallback: v7x per-core VMEM
    # <= ~80% of capacity, with extra headroom for Mosaic internal scratch.
    vmem_limit = min(int(0.8 * vmem_cap), vmem_cap - (8 << 20))
    budget = vmem_limit - (6 << 20)

    def footprint(tm_, tk_):
        # Honest accounting: pipelined inputs are double-buffered (x2) plus one
        # in-flight value copy; weights are tiny but counted double-buffered too.
        return (3 * tm_ * tk_ * isz              # adj slabs
                + 3 * tk_ * d * isz              # seq K-blocks
                + 4 * tm_ * d                    # f32 aggr accumulator scratch
                + 8 * (d * h + h * h + 4 * h)    # resident weights (x2 buffers)
                + 8 * tm_ * h                    # h1 / e1 intermediates
                + 8 * tm_)                       # output tile

    if _force_tiles is not None:
        tm, tk = _force_tiles
    else:
        # Row tile: a full-dim block for small M (always layout-legal), else a
        # multiple of 8.  K tile: full N, or a multiple of 128 when shrunk.
        tm = m if (m <= 512 and m % 8 != 0) else min(512, _round_up(m, 8))
        tk = n_nodes
        while footprint(tm, tk) > budget:
            if tk > 1024:
                tk = _halve_mult(tk, 128)
            elif tm > 128:
                tm = _halve_mult(tm, 8)
            elif tk > 128:
                tk = _halve_mult(tk, 128)
            elif tm > 8:
                tm = _halve_mult(tm, 8)
            else:
                break
        # Best effort: an even (>=2) number of row tiles so v7x's two
        # TensorCores both get work on the "parallel" axis (no-op on v5e/v6e).
        nt = _cdiv(m, tm)
        if m >= 16 and nt % 2 == 1:
            cand = _round_up(_cdiv(m, nt + 1), 8)
            if cand >= 8 and _cdiv(m, cand) % 2 == 0 \
                    and footprint(cand, tk) <= budget:
                tm = cand

    nt = _cdiv(m, tm)
    nk = _cdiv(n_nodes, tk)
    mask_k = (n_nodes % tk) != 0

    out_tiles = pl.pallas_call(
        _make_kernel(n_nodes, tk, mask_k, stream_prec),
        out_shape=jax.ShapeDtypeStruct((nt, 1, tm), jnp.float32),
        grid=(nt, nk),
        in_specs=[
            # adj rows: the dominant HBM stream, pipelined (TM, TK) slabs.
            pl.BlockSpec((tm, tk), lambda i, k: (i, k)),
            # seq: streamed along the contraction axis only.
            pl.BlockSpec((tk, d), lambda i, k: (k, 0)),
            # weights: tiny, VMEM-resident (constant block index).
            pl.BlockSpec((d, h), lambda i, k: (0, 0)),
            pl.BlockSpec((h, h), lambda i, k: (0, 0)),
            pl.BlockSpec((1, h), lambda i, k: (0, 0)),
            pl.BlockSpec((1, h), lambda i, k: (0, 0)),
            # b2: single scalar in SMEM, not a padded VMEM tile.
            pl.BlockSpec(memory_space=pltpu.MemorySpace.SMEM),
        ],
        out_specs=pl.BlockSpec((1, 1, tm), lambda i, k: (i, 0, 0)),
        scratch_shapes=[pltpu.VMEM((tm, d), jnp.float32)],
        compiler_params=pltpu.CompilerParams(
            dimension_semantics=("parallel", "arbitrary"),
            vmem_limit_bytes=int(vmem_limit)),
    )(adj_rows, seq_s, params["w1"], params["wf1"], params["b1"],
      params["wf2"], params["b2"])

    # (nt, 1, tm) -> (m, 1): tiles are row-major over the m axis; entries past
    # m in the (only, last) partial tile are garbage and sliced off here.
    return out_tiles.reshape(-1)[:m][:, None]


def _xavier_uniform(key, fan_in, fan_out, shape):
    bound = math.sqrt(6.0 / (fan_in + fan_out))
    return jax.random.uniform(key, shape, jnp.float32,
                              minval=-bound, maxval=bound)


def init_params(key, input_dim, hidden_size):
    k1, k2, k3, k4, k5 = jax.random.split(key, 5)
    # Aggr_module.fc_1: Linear(input_dim, hidden), bias=False -> stored [in, out]
    w1 = _xavier_uniform(k1, input_dim, hidden_size, (input_dim, hidden_size))
    # Est_module.fc1: Linear(hidden, hidden) with bias         -> stored [in, out]
    wf1 = _xavier_uniform(k2, hidden_size, hidden_size,
                          (hidden_size, hidden_size))
    b1 = jax.random.uniform(k3, (1, hidden_size), jnp.float32,
                            minval=-1.0 / math.sqrt(hidden_size),
                            maxval=1.0 / math.sqrt(hidden_size))
    # Est_module.fc2: Linear(hidden, 1) with bias -> weight kept in PyTorch
    # [out=1, in=hidden] layout (row vector) for the in-kernel (1,H)@(H,TM).
    wf2 = _xavier_uniform(k4, hidden_size, 1, (1, hidden_size))
    b2 = jax.random.uniform(k5, (1,), jnp.float32,
                            minval=-1.0 / math.sqrt(hidden_size),
                            maxval=1.0 / math.sqrt(hidden_size))
    return {"w1": w1, "wf1": wf1, "b1": b1, "wf2": wf2, "b2": b2}


def reference_forward(seq, adj, params, user_i=None):
    # Pure-JAX reference mirroring the PyTorch module in true f32.
    hp = jax.lax.Precision.HIGHEST
    aggr = jnp.dot(adj, seq, precision=hp)
    h1 = jnp.maximum(jnp.dot(aggr, params["w1"], precision=hp), 0.0)
    if user_i is not None:
        h1 = h1[user_i]
    e1 = jnp.maximum(jnp.dot(h1, params["wf1"], precision=hp) + params["b1"],
                     0.0)
    return jnp.dot(e1, params["wf2"].T, precision=hp) + params["b2"]


if __name__ == "__main__":
    key = jax.random.PRNGKey(0)
    k_seq, k_adj, k_par, k2_seq, k2_adj, k2_par = jax.random.split(key, 6)

    # --- Test 1: shapes implied by GNN_Exploitation_Net(user_n=8, input_dim=2,
    # hidden_size=32, num_layer=-1): extended_seq dim = input_dim * user_n = 16.
    N, D, H = 8, 16, 32
    seq = jax.random.normal(k_seq, (N, D), jnp.float32)
    raw = jax.random.uniform(k_adj, (N, N), jnp.float32) + jnp.eye(N)
    adj = raw / jnp.sum(raw, axis=1, keepdims=True)
    user_i = jnp.array([0, 2, 5, 7], dtype=jnp.int32)
    params = init_params(k_par, D, H)

    out = jax.block_until_ready(
        gnn_exploitation_forward(seq, adj, params, user_i))
    ref = reference_forward(seq, adj, params, user_i)
    assert out.shape == (user_i.shape[0], 1)
    assert jnp.allclose(out, ref, atol=1e-5, rtol=1e-5), \
        float(jnp.abs(out - ref).max())

    # All-users path (user_i = None).
    out_all = jax.block_until_ready(gnn_exploitation_forward(seq, adj, params))
    ref_all = reference_forward(seq, adj, params)
    assert out_all.shape == (N, 1)
    assert jnp.allclose(out_all, ref_all, atol=1e-5, rtol=1e-5), \
        float(jnp.abs(out_all - ref_all).max())

    # --- Test 2: exercise the general tiling path (multiple row tiles,
    # multiple + masked K tiles, partial edge blocks) with forced small tiles.
    N2, D2, H2 = 200, 16, 32
    seq2 = jax.random.normal(k2_seq, (N2, D2), jnp.float32)
    raw2 = jax.random.uniform(k2_adj, (N2, N2), jnp.float32) + jnp.eye(N2)
    adj2 = raw2 / jnp.sum(raw2, axis=1, keepdims=True)
    user_i2 = jnp.array([0, 3, 5, 17, 42, 77, 101, 128, 150, 177, 199],
                        dtype=jnp.int32)
    params2 = init_params(k2_par, D2, H2)

    out2 = jax.block_until_ready(
        gnn_exploitation_forward(seq2, adj2, params2, user_i2,
                                 _force_tiles=(8, 128)))
    ref2 = reference_forward(seq2, adj2, params2, user_i2)
    assert out2.shape == (user_i2.shape[0], 1)
    assert jnp.allclose(out2, ref2, atol=1e-5, rtol=1e-5), \
        float(jnp.abs(out2 - ref2).max())

    print("KERNEL_OK")
</pallas_src>

<mosaic_0001>
module attributes {stable_mosaic.version = 11 : i64} {
  func.func @kernel(%arg0: i32, %arg1: i32, %arg2: memref<4x8xf32, #tpu.memory_space<vmem>>, %arg3: memref<8x16xf32, #tpu.memory_space<vmem>>, %arg4: memref<16x32xf32, #tpu.memory_space<vmem>>, %arg5: memref<32x32xf32, #tpu.memory_space<vmem>>, %arg6: memref<1x32xf32, #tpu.memory_space<vmem>>, %arg7: memref<1x32xf32, #tpu.memory_space<vmem>>, %arg8: memref<1xf32, #tpu.memory_space<smem>>, %arg9: memref<1x1x4xf32, #tpu.memory_space<vmem>>, %arg10: memref<4x16xf32, #tpu.memory_space<vmem>>) attributes {dimension_semantics = [#tpu.dimension_semantics<parallel>, #tpu.dimension_semantics<arbitrary>], iteration_bounds = array<i64: 1, 1>, scalar_prefetch = 0 : i64, scratch_operands = 1 : i64, tpu.core_type = #tpu.core_type<tc>, window_params = [{transform_indices = @transform_0, window_bounds = array<i64: 4, 8>}, {transform_indices = @transform_1, window_bounds = array<i64: 8, 16>}, {pipeline_mode = #tpu.pipeline_mode<synchronous>, transform_indices = @transform_2, window_bounds = array<i64: 16, 32>}, {pipeline_mode = #tpu.pipeline_mode<synchronous>, transform_indices = @transform_3, window_bounds = array<i64: 32, 32>}, {pipeline_mode = #tpu.pipeline_mode<synchronous>, transform_indices = @transform_4, window_bounds = array<i64: 1, 32>}, {pipeline_mode = #tpu.pipeline_mode<synchronous>, transform_indices = @transform_5, window_bounds = array<i64: 1, 32>}, {transform_indices = @transform_6, window_bounds = array<i64: 1>}, {transform_indices = @transform_7, window_bounds = array<i64: 1, 1, 4>}]} {
    %c0_i32 = arith.constant 0 : i32
    %0 = arith.cmpi eq, %arg1, %c0_i32 : i32
    %1 = arith.extui %0 : i1 to i32
    %c0_i32_0 = arith.constant 0 : i32
    %2 = arith.cmpi ne, %1, %c0_i32_0 : i32
    scf.if %2 {
      %cst_10 = arith.constant 0.000000e+00 : f32
      %12 = vector.broadcast %cst_10 : f32 to vector<4x16xf32>
      %c0_11 = arith.constant 0 : index
      %c0_12 = arith.constant 0 : index
      %13 = vector.load %arg10[%c0_11, %c0_12] : memref<4x16xf32, #tpu.memory_space<vmem>>, vector<4x16xf32>
      tpu.vector_store %arg10[%c0_11, %c0_12], %12 {strides = array<i32>} : memref<4x16xf32, #tpu.memory_space<vmem>>, vector<4x16xf32>,
    } else {
    }
    %c0 = arith.constant 0 : index
    %c0_1 = arith.constant 0 : index
    %3 = vector.load %arg2[%c0, %c0_1] : memref<4x8xf32, #tpu.memory_space<vmem>>, vector<4x8xf32>
    %c0_2 = arith.constant 0 : index
    %c0_3 = arith.constant 0 : index
    %4 = vector.load %arg3[%c0_2, %c0_3] : memref<8x16xf32, #tpu.memory_space<vmem>>, vector<8x16xf32>
    %c0_4 = arith.constant 0 : index
    %c0_5 = arith.constant 0 : index
    %5 = vector.load %arg10[%c0_4, %c0_5] : memref<4x16xf32, #tpu.memory_space<vmem>>, vector<4x16xf32>
    %cst = arith.constant dense<0.000000e+00> : vector<4x16xf32>
    %6 = tpu.matmul %3, %4, %cst {dimension_numbers = #tpu.dot_dimension_numbers<[1], [0], [0], [1], [0, 0, 1, 1], [], []>, precision = #tpu.contract_precision<fp32>} : vector<4x8xf32>, vector<8x16xf32>, vector<4x16xf32> -> vector<4x16xf32>
    %7 = arith.addf %5, %6 : vector<4x16xf32>
    %c0_6 = arith.constant 0 : index
    %c0_7 = arith.constant 0 : index
    %8 = vector.load %arg10[%c0_6, %c0_7] : memref<4x16xf32, #tpu.memory_space<vmem>>, vector<4x16xf32>
    tpu.vector_store %arg10[%c0_6, %c0_7], %7 {strides = array<i32>} : memref<4x16xf32, #tpu.memory_space<vmem>>, vector<4x16xf32>,
    %c0_i32_8 = arith.constant 0 : i32
    %9 = arith.cmpi eq, %arg1, %c0_i32_8 : i32
    %10 = arith.extui %9 : i1 to i32
    %c0_i32_9 = arith.constant 0 : i32
    %11 = arith.cmpi ne, %10, %c0_i32_9 : i32
    scf.if %11 {
      %c0_10 = arith.constant 0 : index
      %c0_11 = arith.constant 0 : index
      %12 = vector.load %arg10[%c0_10, %c0_11] : memref<4x16xf32, #tpu.memory_space<vmem>>, vector<4x16xf32>
      %c0_12 = arith.constant 0 : index
      %c0_13 = arith.constant 0 : index
      %13 = vector.load %arg4[%c0_12, %c0_13] : memref<16x32xf32, #tpu.memory_space<vmem>>, vector<16x32xf32>
      %cst_14 = arith.constant dense<0.000000e+00> : vector<4x32xf32>
      %14 = tpu.matmul %12, %13, %cst_14 {dimension_numbers = #tpu.dot_dimension_numbers<[1], [0], [0], [1], [0, 0, 1, 1], [], []>, precision = #tpu.contract_precision<fp32>} : vector<4x16xf32>, vector<16x32xf32>, vector<4x32xf32> -> vector<4x32xf32>
      %cst_15 = arith.constant 0.000000e+00 : f32
      %15 = vector.broadcast %cst_15 : f32 to vector<4x32xf32>
      %16 = arith.maximumf %14, %15 : vector<4x32xf32>
      %c0_16 = arith.constant 0 : index
      %c0_17 = arith.constant 0 : index
      %17 = vector.load %arg5[%c0_16, %c0_17] : memref<32x32xf32, #tpu.memory_space<vmem>>, vector<32x32xf32>
      %cst_18 = arith.constant dense<0.000000e+00> : vector<4x32xf32>
      %18 = tpu.matmul %16, %17, %cst_18 {dimension_numbers = #tpu.dot_dimension_numbers<[1], [0], [0], [1], [0, 0, 1, 1], [], []>, precision = #tpu.contract_precision<fp32>} : vector<4x32xf32>, vector<32x32xf32>, vector<4x32xf32> -> vector<4x32xf32>
      %c0_19 = arith.constant 0 : index
      %c0_20 = arith.constant 0 : index
      %19 = vector.load %arg6[%c0_19, %c0_20] : memref<1x32xf32, #tpu.memory_space<vmem>>, vector<1x32xf32>
      %20 = vector.broadcast %19 : vector<1x32xf32> to vector<4x32xf32>
      %21 = arith.addf %18, %20 : vector<4x32xf32>
      %cst_21 = arith.constant 0.000000e+00 : f32
      %22 = vector.broadcast %cst_21 : f32 to vector<4x32xf32>
      %23 = arith.maximumf %21, %22 : vector<4x32xf32>
      %c0_22 = arith.constant 0 : index
      %c0_23 = arith.constant 0 : index
      %24 = vector.load %arg7[%c0_22, %c0_23] : memref<1x32xf32, #tpu.memory_space<vmem>>, vector<1x32xf32>
      %cst_24 = arith.constant dense<0.000000e+00> : vector<1x4xf32>
      %25 = tpu.matmul %24, %23, %cst_24 {dimension_numbers = #tpu.dot_dimension_numbers<[1], [1], [0], [0], [0, 0, 1, 0], [], []>, precision = #tpu.contract_precision<fp32>} : vector<1x32xf32>, vector<4x32xf32>, vector<1x4xf32> -> vector<1x4xf32>
      %c0_25 = arith.constant 0 : index
      %26 = memref.load %arg8[%c0_25] : memref<1xf32, #tpu.memory_space<smem>>
      %27 = vector.broadcast %26 : f32 to vector<1x4xf32>
      %28 = arith.addf %25, %27 : vector<1x4xf32>
      %29 = vector.shape_cast %28 : vector<1x4xf32> to vector<1x1x4xf32>
      %c0_26 = arith.constant 0 : index
      %c0_27 = arith.constant 0 : index
      %c0_28 = arith.constant 0 : index
      %30 = vector.load %arg9[%c0_26, %c0_27, %c0_28] : memref<1x1x4xf32, #tpu.memory_space<vmem>>, vector<1x1x4xf32>
      tpu.vector_store %arg9[%c0_26, %c0_27, %c0_28], %29 {strides = array<i32>} : memref<1x1x4xf32, #tpu.memory_space<vmem>>, vector<1x1x4xf32>,
    } else {
    }
    return
  }
  func.func @transform_0(%arg0: i32, %arg1: i32) -> (i32, i32) {
    %c0_i32 = arith.constant 0 : i32
    return %arg0, %arg1 : i32, i32
  }
  func.func @transform_1(%arg0: i32, %arg1: i32) -> (i32, i32) {
    %c0_i32 = arith.constant 0 : i32
    %c0_i32_0 = arith.constant 0 : i32
    return %arg1, %c0_i32 : i32, i32
  }
  func.func @transform_2(%arg0: i32, %arg1: i32) -> (i32, i32) {
    %c0_i32 = arith.constant 0 : i32
    %c0_i32_0 = arith.constant 0 : i32
    %c0_i32_1 = arith.constant 0 : i32
    return %c0_i32, %c0_i32_0 : i32, i32
  }
  func.func @transform_3(%arg0: i32, %arg1: i32) -> (i32, i32) {
    %c0_i32 = arith.constant 0 : i32
    %c0_i32_0 = arith.constant 0 : i32
    %c0_i32_1 = arith.constant 0 : i32
    return %c0_i32, %c0_i32_0 : i32, i32
  }
  func.func @transform_4(%arg0: i32, %arg1: i32) -> (i32, i32) {
    %c0_i32 = arith.constant 0 : i32
    %c0_i32_0 = arith.constant 0 : i32
    %c0_i32_1 = arith.constant 0 : i32
    return %c0_i32, %c0_i32_0 : i32, i32
  }
  func.func @transform_5(%arg0: i32, %arg1: i32) -> (i32, i32) {
    %c0_i32 = arith.constant 0 : i32
    %c0_i32_0 = arith.constant 0 : i32
    %c0_i32_1 = arith.constant 0 : i32
    return %c0_i32, %c0_i32_0 : i32, i32
  }
  func.func @transform_6(%arg0: i32, %arg1: i32) -> i32 {
    %c0_i32 = arith.constant 0 : i32
    %c0_i32_0 = arith.constant 0 : i32
    return %c0_i32 : i32
  }
  func.func @transform_7(%arg0: i32, %arg1: i32) -> (i32, i32, i32) {
    %c0_i32 = arith.constant 0 : i32
    %c0_i32_0 = arith.constant 0 : i32
    %c0_i32_1 = arith.constant 0 : i32
    return %arg0, %c0_i32, %c0_i32_0 : i32, i32, i32
  }
}

</mosaic_0001>

<llo_original>
// kernel: tpu_custom_call.1
$region0: #{tpu_custom_call.1}
  #allocation0 [shape = 'u32[]', space=smem, size = 0x4, offset = 0x4, fixed_abs, tag = 'smem constant byte address 0x4 - core index']
  #allocation1 [shape = 'u32[72,128]{1,0:T(1,128)}', space=vmem, size = 0x9000, scoped, tag = 'internal scratch']
  #allocation2 [shape = 'f32[4,16]{1,0:T(4,128)}', space=vmem, size = 0x800, scoped, tag = 'scratch operand']
  #allocation3 [shape = 'f32[1]{0:T(128)S(6)}', space=smem, size = 0x200, scoped, tag = 'scoped memory for tpu_custom_call.1']
  %s0 = inlined_call_operand.hbm [shape: f32[4,8], index: 0, kind: input, shape index: {}]
  %s1 = inlined_call_operand.hbm [shape: f32[8,16], index: 1, kind: input, shape index: {}]
  %s2 = inlined_call_operand.hbm [shape: f32[16,32], index: 2, kind: input, shape index: {}]
  %s3 = inlined_call_operand.hbm [shape: f32[32,32], index: 3, kind: input, shape index: {}]
  %s4 = inlined_call_operand.vmem [shape: f32[1,32], index: 4, kind: input, shape index: {}]
  %s5 = inlined_call_operand.vmem [shape: f32[1,32], index: 5, kind: input, shape index: {}]
  %s6 = inlined_call_operand.<no memory space> [shape: f32[1], index: 6, kind: input, shape index: {}]
  %s7 = inlined_call_operand.hbm [shape: f32[1,1,4], index: 7, kind: output, shape index: {}]
  %s8 = sld [smem:[#allocation0]]
  $region62: #{tpu_custom_call.1} parent=0
    _
  %s10 = ssub.s32 1, %s8
  %s11 = scalar_select 0, %s10, %s8
  %12 = sst [smem:[#allocation3]] %s6
  $region1: #{tpu_custom_call.1} parent=0
    #allocation4 [shape = 'u8[2048]{0}', space=vmem, size = 0x800, scoped, tag = 'input window, operand 0, single buffered']
    #allocation5 [shape = 's32[1]{0}', space=sflag, size = 0x4, scoped, tag = 'scoped memory for tpu_custom_call.1']
    #allocation6 [shape = 's32[1]{0}', space=sflag, size = 0x4, scoped, tag = 'scoped memory for tpu_custom_call.1']
    #allocation7 [shape = 'u8[4096]{0}', space=vmem, size = 0x1000, scoped, tag = 'input window, operand 1, single buffered']
    #allocation8 [shape = 's32[1]{0}', space=sflag, size = 0x4, scoped, tag = 'scoped memory for tpu_custom_call.1']
    #allocation9 [shape = 'u8[8192]{0}', space=vmem, size = 0x2000, scoped, tag = 'input window, operand 2, single buffered']
    #allocation10 [shape = 'u8[16384]{0}', space=vmem, size = 0x4000, scoped, tag = 'input window, operand 3, single buffered']
    #allocation11 [shape = 's32[1]{0}', space=sflag, size = 0x4, scoped, tag = 'scoped memory for tpu_custom_call.1']
    #allocation12 [shape = 'u8[512]{0}', space=vmem, size = 0x400, scoped, tag = 'output window, operand 0, single buffered']
    %13 = vsyncpa [#allocation5], 0
    %14 = vsyncpa [#allocation8], 0
    %15 = vsyncpa [#allocation11], 0
    %16 = vsyncpa [#allocation6], 0
    // Predicated region
    $region2: #{tpu_custom_call.1} parent=1 // pred_check
      _
    $region3: #{tpu_custom_call.1} parent=1 // pred_check_branch
      %18 = sbr.rel (0) target = $region5
    $region4: #{tpu_custom_call.1} parent=1 // pred_region
      %20 = vsyncadd [#allocation5], 0
      %s22 = sshll.u32 %s0, 4
      %s23 = int_to_ptr.hbm [resolvable:$true] %s22
      %s24 = sshll.u32 [#allocation4], 4
      %s25 = int_to_ptr.vmem [resolvable:$true] %s24
      %27 = dma.hbm_to_vmem [thread:$0]  %s23, 64, %s25, [#allocation5]
    $region5: #{tpu_custom_call.1} parent=1 // pred_fallthru
      _
    // Predicated region
    $region6: #{tpu_custom_call.1} parent=1 // pred_check
      _
    $region7: #{tpu_custom_call.1} parent=1 // pred_check_branch
      %29 = sbr.rel (0) target = $region9
    $region8: #{tpu_custom_call.1} parent=1 // pred_region
      %31 = vsyncadd [#allocation8], 0
      %s33 = sshll.u32 %s1, 4
      %s34 = int_to_ptr.hbm [resolvable:$true] %s33
      %s35 = sshll.u32 [#allocation7], 4
      %s36 = int_to_ptr.vmem [resolvable:$true] %s35
      %38 = dma.hbm_to_vmem [thread:$0]  %s34, 128, %s36, [#allocation8]
    $region9: #{tpu_custom_call.1} parent=1 // pred_fallthru
      _
    // Predicated region
    $region10: #{tpu_custom_call.1} parent=1 // pred_check
      _
    $region11: #{tpu_custom_call.1} parent=1 // pred_check_branch
      %40 = sbr.rel (0) target = $region13
    $region12: #{tpu_custom_call.1} parent=1 // pred_region
      %42 = vsyncadd [#allocation8], 0
      %s43 = sshll.u32 %s2, 4
      %s44 = int_to_ptr.hbm [resolvable:$true] %s43
      %s45 = sshll.u32 [#allocation9], 4
      %s46 = int_to_ptr.vmem [resolvable:$true] %s45
      %51 = dma.hbm_to_vmem [thread:$0]  %s44, 256, %s46, [#allocation8], 128, 128, 8
    $region13: #{tpu_custom_call.1} parent=1 // pred_fallthru
      _
    // Predicated region
    $region14: #{tpu_custom_call.1} parent=1 // pred_check
      _
    $region15: #{tpu_custom_call.1} parent=1 // pred_check_branch
      %53 = sbr.rel (0) target = $region17
    $region16: #{tpu_custom_call.1} parent=1 // pred_region
      %55 = vsyncadd [#allocation11], 0
      %s56 = sshll.u32 %s3, 4
      %s57 = int_to_ptr.hbm [resolvable:$true] %s56
      %s58 = sshll.u32 [#allocation10], 4
      %s59 = int_to_ptr.vmem [resolvable:$true] %s58
      %64 = dma.hbm_to_vmem [thread:$0]  %s57, 512, %s59, [#allocation11], 128, 128, 8
    $region17: #{tpu_custom_call.1} parent=1 // pred_fallthru
      _
    // Predicated region
    $region18: #{tpu_custom_call.1} parent=1 // pred_check
      _
    $region19: #{tpu_custom_call.1} parent=1 // pred_check_branch
      %66 = sbr.rel (0) target = $region21
    $region20: #{tpu_custom_call.1} parent=1 // pred_region
      _
    $region21: #{tpu_custom_call.1} parent=1 // pred_fallthru
      _
    // Predicated region
    $region22: #{tpu_custom_call.1} parent=1 // pred_check
      _
    $region23: #{tpu_custom_call.1} parent=1 // pred_check_branch
      %68 = sbr.rel (0) target = $region25
    $region24: #{tpu_custom_call.1} parent=1 // pred_region
      _
    $region25: #{tpu_custom_call.1} parent=1 // pred_fallthru
      _
    // Predicated region
    $region26: #{tpu_custom_call.1} parent=1 // pred_check
      _
    $region27: #{tpu_custom_call.1} parent=1 // pred_check_branch
      %70 = sbr.rel (0) target = $region29
    $region28: #{tpu_custom_call.1} parent=1 // pred_region
      _
    $region29: #{tpu_custom_call.1} parent=1 // pred_fallthru
      _
    // Predicated region
    $region30: #{tpu_custom_call.1} parent=1 // pred_check
      _
    $region31: #{tpu_custom_call.1} parent=1 // pred_check_branch
      %72 = sbr.rel (0) target = $region33
    $region32: #{tpu_custom_call.1} parent=1 // pred_region
      %74 = dma.done [#allocation5], 64
    $region33: #{tpu_custom_call.1} parent=1 // pred_fallthru
      _
    // Predicated region
    $region34: #{tpu_custom_call.1} parent=1 // pred_check
      _
    $region35: #{tpu_custom_call.1} parent=1 // pred_check_branch
      %76 = sbr.rel (0) target = $region37
    $region36: #{tpu_custom_call.1} parent=1 // pred_region
      %78 = dma.done [#allocation8], 128
    $region37: #{tpu_custom_call.1} parent=1 // pred_fallthru
      _
    // Predicated region
    $region38: #{tpu_custom_call.1} parent=1 // pred_check
      _
    $region39: #{tpu_custom_call.1} parent=1 // pred_check_branch
      %80 = sbr.rel (0) target = $region41
    $region40: #{tpu_custom_call.1} parent=1 // pred_region
      %82 = dma.done [#allocation8], 256
    $region41: #{tpu_custom_call.1} parent=1 // pred_fallthru
      _
    // Predicated region
    $region42: #{tpu_custom_call.1} parent=1 // pred_check
      _
    $region43: #{tpu_custom_call.1} parent=1 // pred_check_branch
      %84 = sbr.rel (0) target = $region45
    $region44: #{tpu_custom_call.1} parent=1 // pred_region
      %86 = dma.done [#allocation11], 512
    $region45: #{tpu_custom_call.1} parent=1 // pred_fallthru
      _
    %p87 = scmp.eq.s32.totalorder 0, 0
    // Predicated region
    $region46: #{tpu_custom_call.1} parent=1 // pred_check
      %p88 = pneg %p87
    $region47: #{tpu_custom_call.1} parent=1 // pred_check_branch
      %90 = sbr.rel (%p88) target = $region49
    $region48: #{tpu_custom_call.1} parent=1 // pred_region
      %vm91 = vcmask 125952
      %92 = vst.msk [vmem:[#allocation2] sm:$0xf] %vm91, 0.0
    $region49: #{tpu_custom_call.1} parent=1 // pred_fallthru
      _
    %v93 = vld [vmem:[#allocation4] sm:$0xf]
    %v94 = vld [vmem:[#allocation7] sm:$0xff]
    %v95 = vld [vmem:[#allocation2] sm:$0xf]
    %vm96 = vcmask 64512
    %v98 = vsel %vm96, %v93, 0
    %100 = vmatpush.msra.mxu0 0.0
    %101 = vmatpush.msra.mxu0 0.0
    %102 = vmatpush.msra.mxu0 0.0
    %103 = vmatpush.msra.mxu0 0.0
    %104 = vmatpush.msra.mxu0 0.0
    %105 = vmatpush.msra.mxu0 0.0
    %106 = vmatpush.msra.mxu0 0.0
    %107 = vmatpush.msra.mxu0 0.0
    %108 = vmatpush.msra.mxu0 0.0
    %109 = vmatpush.msra.mxu0 0.0
    %110 = vmatpush.msra.mxu0 0.0
    %111 = vmatpush.msra.mxu0 0.0
    %112 = vmatpush.msra.mxu0 0.0
    %113 = vmatpush.msra.mxu0 0.0
    %114 = vmatpush.msra.mxu0 0.0
    %v115 = vand.u32 %v94, 4294901760
    %116 = vmatpush.msra.mxu0 %v115
    %v117 = vand.u32 %v98, 4294901760
    %v118 = vsub.f32 %v98, %v117
    %v119 = vand.u32 %v118, 4294901760
    %v120 = vsub.f32 %v118, %v119
    %v121 = vand.u32 %v120, 4294901760
    %122 = vmatmul.f32.gmra.mxu0 %v121
    %v123 = vpop.f32.mrf.mxu0
    %v124 = vadd.f32 0.0, %v123
    %125 = vdwg.mxu0
    %126 = vmatpush.msra.mxu0 0.0
    %127 = vmatpush.msra.mxu0 0.0
    %128 = vmatpush.msra.mxu0 0.0
    %129 = vmatpush.msra.mxu0 0.0
    %130 = vmatpush.msra.mxu0 0.0
    %131 = vmatpush.msra.mxu0 0.0
    %132 = vmatpush.msra.mxu0 0.0
    %133 = vmatpush.msra.mxu0 0.0
    %134 = vmatpush.msra.mxu0 0.0
    %135 = vmatpush.msra.mxu0 0.0
    %136 = vmatpush.msra.mxu0 0.0
    %137 = vmatpush.msra.mxu0 0.0
    %138 = vmatpush.msra.mxu0 0.0
    %139 = vmatpush.msra.mxu0 0.0
    %140 = vmatpush.msra.mxu0 0.0
    %v141 = vand.u32 %v94, 4294901760
    %v142 = vsub.f32 %v94, %v141
    %v143 = vand.u32 %v142, 4294901760
    %v144 = vsub.f32 %v142, %v143
    %v145 = vand.u32 %v144, 4294901760
    %146 = vmatpush.msra.mxu0 %v145
    %v147 = vand.u32 %v98, 4294901760
    %148 = vmatmul.f32.gmra.mxu0 %v147
    %v149 = vpop.f32.mrf.mxu0
    %v150 = vadd.f32 %v124, %v149
    %151 = vdwg.mxu0
    %152 = vmatpush.msra.mxu0 0.0
    %153 = vmatpush.msra.mxu0 0.0
    %154 = vmatpush.msra.mxu0 0.0
    %155 = vmatpush.msra.mxu0 0.0
    %156 = vmatpush.msra.mxu0 0.0
    %157 = vmatpush.msra.mxu0 0.0
    %158 = vmatpush.msra.mxu0 0.0
    %159 = vmatpush.msra.mxu0 0.0
    %160 = vmatpush.msra.mxu0 0.0
    %161 = vmatpush.msra.mxu0 0.0
    %162 = vmatpush.msra.mxu0 0.0
    %163 = vmatpush.msra.mxu0 0.0
    %164 = vmatpush.msra.mxu0 0.0
    %165 = vmatpush.msra.mxu0 0.0
    %166 = vmatpush.msra.mxu0 0.0
    %v167 = vand.u32 %v94, 4294901760
    %v168 = vsub.f32 %v94, %v167
    %169 = vmatpush.msra.mxu0 %v168
    %v170 = vand.u32 %v98, 4294901760
    %v171 = vsub.f32 %v98, %v170
    %172 = vmatmul.f32.gmra.mxu0 %v171
    %v173 = vpop.f32.mrf.mxu0
    %v174 = vadd.f32 %v150, %v173
    %175 = vdwg.mxu0
    %176 = vmatpush.msra.mxu0 0.0
    %177 = vmatpush.msra.mxu0 0.0
    %178 = vmatpush.msra.mxu0 0.0
    %179 = vmatpush.msra.mxu0 0.0
    %180 = vmatpush.msra.mxu0 0.0
    %181 = vmatpush.msra.mxu0 0.0
    %182 = vmatpush.msra.mxu0 0.0
    %183 = vmatpush.msra.mxu0 0.0
    %184 = vmatpush.msra.mxu0 0.0
    %185 = vmatpush.msra.mxu0 0.0
    %186 = vmatpush.msra.mxu0 0.0
    %187 = vmatpush.msra.mxu0 0.0
    %188 = vmatpush.msra.mxu0 0.0
    %189 = vmatpush.msra.mxu0 0.0
    %190 = vmatpush.msra.mxu0 0.0
    %v191 = vand.u32 %v94, 4294901760
    %192 = vmatpush.msra.mxu0 %v191
    %v193 = vand.u32 %v98, 4294901760
    %v194 = vsub.f32 %v98, %v193
    %v195 = vand.u32 %v194, 4294901760
    %196 = vmatmul.f32.gmra.mxu0 %v195
    %v197 = vpop.f32.mrf.mxu0
    %v198 = vadd.f32 %v174, %v197
    %199 = vdwg.mxu0
    %200 = vmatpush.msra.mxu0 0.0
    %201 = vmatpush.msra.mxu0 0.0
    %202 = vmatpush.msra.mxu0 0.0
    %203 = vmatpush.msra.mxu0 0.0
    %204 = vmatpush.msra.mxu0 0.0
    %205 = vmatpush.msra.mxu0 0.0
    %206 = vmatpush.msra.mxu0 0.0
    %207 = vmatpush.msra.mxu0 0.0
    %208 = vmatpush.msra.mxu0 0.0
    %209 = vmatpush.msra.mxu0 0.0
    %210 = vmatpush.msra.mxu0 0.0
    %211 = vmatpush.msra.mxu0 0.0
    %212 = vmatpush.msra.mxu0 0.0
    %213 = vmatpush.msra.mxu0 0.0
    %214 = vmatpush.msra.mxu0 0.0
    %v215 = vand.u32 %v94, 4294901760
    %v216 = vsub.f32 %v94, %v215
    %v217 = vand.u32 %v216, 4294901760
    %218 = vmatpush.msra.mxu0 %v217
    %v219 = vand.u32 %v98, 4294901760
    %220 = vmatmul.f32.gmra.mxu0 %v219
    %v221 = vpop.f32.mrf.mxu0
    %v222 = vadd.f32 %v198, %v221
    %223 = vdwg.mxu0
    %224 = vmatpush.msra.mxu0 0.0
    %225 = vmatpush.msra.mxu0 0.0
    %226 = vmatpush.msra.mxu0 0.0
    %227 = vmatpush.msra.mxu0 0.0
    %228 = vmatpush.msra.mxu0 0.0
    %229 = vmatpush.msra.mxu0 0.0
    %230 = vmatpush.msra.mxu0 0.0
    %231 = vmatpush.msra.mxu0 0.0
    %232 = vmatpush.msra.mxu0 0.0
    %233 = vmatpush.msra.mxu0 0.0
    %234 = vmatpush.msra.mxu0 0.0
    %235 = vmatpush.msra.mxu0 0.0
    %236 = vmatpush.msra.mxu0 0.0
    %237 = vmatpush.msra.mxu0 0.0
    %238 = vmatpush.msra.mxu0 0.0
    %v239 = vand.u32 %v94, 4294901760
    %240 = vmatpush.msra.mxu0 %v239
    %v241 = vand.u32 %v98, 4294901760
    %242 = vmatmul.f32.gmra.mxu0 %v241
    %v243 = vpop.f32.mrf.mxu0
    %v244 = vadd.f32 %v222, %v243
    %245 = vdwg.mxu0
    %v246 = vadd.f32 %v95, %v244
    %vm247 = vcmask 125952
    %248 = vst.msk [vmem:[#allocation2] sm:$0xf] %vm247, %v246
    // Predicated region
    $region50: #{tpu_custom_call.1} parent=1 // pred_check
      %p249 = pneg %p87
    $region51: #{tpu_custom_call.1} parent=1 // pred_check_branch
      %251 = sbr.rel (%p249) target = $region53
    $region52: #{tpu_custom_call.1} parent=1 // pred_region
      %v252 = vld [vmem:[#allocation2] sm:$0xf]
      %v253 = vld [vmem:[#allocation9] sm:$0xff]
      %v254 = vld [vmem:[#allocation9 + $0x8] sm:$0xff]
      %vm255 = vcmask 130048
      %v257 = vsel %vm255, %v252, 0
      %259 = vmatpush.msra.mxu0 0.0
      %260 = vmatpush.msra.mxu0 0.0
      %261 = vmatpush.msra.mxu0 0.0
      %262 = vmatpush.msra.mxu0 0.0
      %263 = vmatpush.msra.mxu0 0.0
      %264 = vmatpush.msra.mxu0 0.0
      %265 = vmatpush.msra.mxu0 0.0
      %266 = vmatpush.msra.mxu0 0.0
      %267 = vmatpush.msra.mxu0 0.0
      %268 = vmatpush.msra.mxu0 0.0
      %269 = vmatpush.msra.mxu0 0.0
      %270 = vmatpush.msra.mxu0 0.0
      %271 = vmatpush.msra.mxu0 0.0
      %272 = vmatpush.msra.mxu0 0.0
      %v273 = vand.u32 %v254, 4294901760
      %274 = vmatpush.msra.mxu0 %v273
      %v275 = vand.u32 %v253, 4294901760
      %276 = vmatpush.msra.mxu0 %v275
      %v277 = vand.u32 %v257, 4294901760
      %v278 = vsub.f32 %v257, %v277
      %v279 = vand.u32 %v278, 4294901760
      %v280 = vsub.f32 %v278, %v279
      %v281 = vand.u32 %v280, 4294901760
      %282 = vmatmul.f32.gmra.mxu0 %v281
      %v283 = vpop.f32.mrf.mxu0
      %v284 = vadd.f32 0.0, %v283
      %285 = vdwg.mxu0
      %286 = vmatpush.msra.mxu0 0.0
      %287 = vmatpush.msra.mxu0 0.0
      %288 = vmatpush.msra.mxu0 0.0
      %289 = vmatpush.msra.mxu0 0.0
      %290 = vmatpush.msra.mxu0 0.0
      %291 = vmatpush.msra.mxu0 0.0
      %292 = vmatpush.msra.mxu0 0.0
      %293 = vmatpush.msra.mxu0 0.0
      %294 = vmatpush.msra.mxu0 0.0
      %295 = vmatpush.msra.mxu0 0.0
      %296 = vmatpush.msra.mxu0 0.0
      %297 = vmatpush.msra.mxu0 0.0
      %298 = vmatpush.msra.mxu0 0.0
      %299 = vmatpush.msra.mxu0 0.0
      %v300 = vand.u32 %v254, 4294901760
      %v301 = vsub.f32 %v254, %v300
      %v302 = vand.u32 %v301, 4294901760
      %v303 = vsub.f32 %v301, %v302
      %v304 = vand.u32 %v303, 4294901760
      %305 = vmatpush.msra.mxu0 %v304
      %v306 = vand.u32 %v253, 4294901760
      %v307 = vsub.f32 %v253, %v306
      %v308 = vand.u32 %v307, 4294901760
      %v309 = vsub.f32 %v307, %v308
      %v310 = vand.u32 %v309, 4294901760
      %311 = vmatpush.msra.mxu0 %v310
      %v312 = vand.u32 %v257, 4294901760
      %313 = vmatmul.f32.gmra.mxu0 %v312
      %v314 = vpop.f32.mrf.mxu0
      %v315 = vadd.f32 %v284, %v314
      %316 = vdwg.mxu0
      %317 = vmatpush.msra.mxu0 0.0
      %318 = vmatpush.msra.mxu0 0.0
      %319 = vmatpush.msra.mxu0 0.0
      %320 = vmatpush.msra.mxu0 0.0
      %321 = vmatpush.msra.mxu0 0.0
      %322 = vmatpush.msra.mxu0 0.0
      %323 = vmatpush.msra.mxu0 0.0
      %324 = vmatpush.msra.mxu0 0.0
      %325 = vmatpush.msra.mxu0 0.0
      %326 = vmatpush.msra.mxu0 0.0
      %327 = vmatpush.msra.mxu0 0.0
      %328 = vmatpush.msra.mxu0 0.0
      %329 = vmatpush.msra.mxu0 0.0
      %330 = vmatpush.msra.mxu0 0.0
      %v331 = vand.u32 %v254, 4294901760
      %v332 = vsub.f32 %v254, %v331
      %333 = vmatpush.msra.mxu0 %v332
      %v334 = vand.u32 %v253, 4294901760
      %v335 = vsub.f32 %v253, %v334
      %336 = vmatpush.msra.mxu0 %v335
      %v337 = vand.u32 %v257, 4294901760
      %v338 = vsub.f32 %v257, %v337
      %339 = vmatmul.f32.gmra.mxu0 %v338
      %v340 = vpop.f32.mrf.mxu0
      %v341 = vadd.f32 %v315, %v340
      %342 = vdwg.mxu0
      %343 = vmatpush.msra.mxu0 0.0
      %344 = vmatpush.msra.mxu0 0.0
      %345 = vmatpush.msra.mxu0 0.0
      %346 = vmatpush.msra.mxu0 0.0
      %347 = vmatpush.msra.mxu0 0.0
      %348 = vmatpush.msra.mxu0 0.0
      %349 = vmatpush.msra.mxu0 0.0
      %350 = vmatpush.msra.mxu0 0.0
      %351 = vmatpush.msra.mxu0 0.0
      %352 = vmatpush.msra.mxu0 0.0
      %353 = vmatpush.msra.mxu0 0.0
      %354 = vmatpush.msra.mxu0 0.0
      %355 = vmatpush.msra.mxu0 0.0
      %356 = vmatpush.msra.mxu0 0.0
      %v357 = vand.u32 %v254, 4294901760
      %358 = vmatpush.msra.mxu0 %v357
      %v359 = vand.u32 %v253, 4294901760
      %360 = vmatpush.msra.mxu0 %v359
      %v361 = vand.u32 %v257, 4294901760
      %v362 = vsub.f32 %v257, %v361
      %v363 = vand.u32 %v362, 4294901760
      %364 = vmatmul.f32.gmra.mxu0 %v363
      %v365 = vpop.f32.mrf.mxu0
      %v366 = vadd.f32 %v341, %v365
      %367 = vdwg.mxu0
      %368 = vmatpush.msra.mxu0 0.0
      %369 = vmatpush.msra.mxu0 0.0
      %370 = vmatpush.msra.mxu0 0.0
      %371 = vmatpush.msra.mxu0 0.0
      %372 = vmatpush.msra.mxu0 0.0
      %373 = vmatpush.msra.mxu0 0.0
      %374 = vmatpush.msra.mxu0 0.0
      %375 = vmatpush.msra.mxu0 0.0
      %376 = vmatpush.msra.mxu0 0.0
      %377 = vmatpush.msra.mxu0 0.0
      %378 = vmatpush.msra.mxu0 0.0
      %379 = vmatpush.msra.mxu0 0.0
      %380 = vmatpush.msra.mxu0 0.0
      %381 = vmatpush.msra.mxu0 0.0
      %v382 = vand.u32 %v254, 4294901760
      %v383 = vsub.f32 %v254, %v382
      %v384 = vand.u32 %v383, 4294901760
      %385 = vmatpush.msra.mxu0 %v384
      %v386 = vand.u32 %v253, 4294901760
      %v387 = vsub.f32 %v253, %v386
      %v388 = vand.u32 %v387, 4294901760
      %389 = vmatpush.msra.mxu0 %v388
      %v390 = vand.u32 %v257, 4294901760
      %391 = vmatmul.f32.gmra.mxu0 %v390
      %v392 = vpop.f32.mrf.mxu0
      %v393 = vadd.f32 %v366, %v392
      %394 = vdwg.mxu0
      %395 = vmatpush.msra.mxu0 0.0
      %396 = vmatpush.msra.mxu0 0.0
      %397 = vmatpush.msra.mxu0 0.0
      %398 = vmatpush.msra.mxu0 0.0
      %399 = vmatpush.msra.mxu0 0.0
      %400 = vmatpush.msra.mxu0 0.0
      %401 = vmatpush.msra.mxu0 0.0
      %402 = vmatpush.msra.mxu0 0.0
      %403 = vmatpush.msra.mxu0 0.0
      %404 = vmatpush.msra.mxu0 0.0
      %405 = vmatpush.msra.mxu0 0.0
      %406 = vmatpush.msra.mxu0 0.0
      %407 = vmatpush.msra.mxu0 0.0
      %408 = vmatpush.msra.mxu0 0.0
      %v409 = vand.u32 %v254, 4294901760
      %410 = vmatpush.msra.mxu0 %v409
      %v411 = vand.u32 %v253, 4294901760
      %412 = vmatpush.msra.mxu0 %v411
      %v413 = vand.u32 %v257, 4294901760
      %414 = vmatmul.f32.gmra.mxu0 %v413
      %v415 = vpop.f32.mrf.mxu0
      %v416 = vadd.f32 %v393, %v415
      %417 = vdwg.mxu0
      %v418 = vmax.f32 %v416, 0.0
      %v419 = vld [vmem:[#allocation10] sm:$0xff]
      %v420 = vld [vmem:[#allocation10 + $0x8] sm:$0xff]
      %v421 = vld [vmem:[#allocation10 + $0x10] sm:$0xff]
      %v422 = vld [vmem:[#allocation10 + $0x18] sm:$0xff]
      %v423 = vld [vmem:[%s4] sm:$0x1]
      %v425 = vperm.slane %v423, 0
      %vm427 = vcmask 261120
      %v429 = vsel %vm427, %v418, 0
      %431 = vmatpush.msra.mxu0 0.0
      %432 = vmatpush.msra.mxu0 0.0
      %433 = vmatpush.msra.mxu0 0.0
      %434 = vmatpush.msra.mxu0 0.0
      %435 = vmatpush.msra.mxu0 0.0
      %436 = vmatpush.msra.mxu0 0.0
      %437 = vmatpush.msra.mxu0 0.0
      %438 = vmatpush.msra.mxu0 0.0
      %439 = vmatpush.msra.mxu0 0.0
      %440 = vmatpush.msra.mxu0 0.0
      %441 = vmatpush.msra.mxu0 0.0
      %442 = vmatpush.msra.mxu0 0.0
      %v443 = vand.u32 %v422, 4294901760
      %444 = vmatpush.msra.mxu0 %v443
      %v445 = vand.u32 %v421, 4294901760
      %446 = vmatpush.msra.mxu0 %v445
      %v447 = vand.u32 %v420, 4294901760
      %448 = vmatpush.msra.mxu0 %v447
      %v449 = vand.u32 %v419, 4294901760
      %450 = vmatpush.msra.mxu0 %v449
      %v451 = vand.u32 %v429, 4294901760
      %v452 = vsub.f32 %v429, %v451
      %v453 = vand.u32 %v452, 4294901760
      %v454 = vsub.f32 %v452, %v453
      %v455 = vand.u32 %v454, 4294901760
      %456 = vmatmul.f32.gmra.mxu0 %v455
      %v457 = vpop.f32.mrf.mxu0
      %v458 = vadd.f32 %v425, %v457
      %459 = vdwg.mxu0
      %460 = vmatpush.msra.mxu0 0.0
      %461 = vmatpush.msra.mxu0 0.0
      %462 = vmatpush.msra.mxu0 0.0
      %463 = vmatpush.msra.mxu0 0.0
      %464 = vmatpush.msra.mxu0 0.0
      %465 = vmatpush.msra.mxu0 0.0
      %466 = vmatpush.msra.mxu0 0.0
      %467 = vmatpush.msra.mxu0 0.0
      %468 = vmatpush.msra.mxu0 0.0
      %469 = vmatpush.msra.mxu0 0.0
      %470 = vmatpush.msra.mxu0 0.0
      %471 = vmatpush.msra.mxu0 0.0
      %v472 = vand.u32 %v422, 4294901760
      %v473 = vsub.f32 %v422, %v472
      %v474 = vand.u32 %v473, 4294901760
      %v475 = vsub.f32 %v473, %v474
      %v476 = vand.u32 %v475, 4294901760
      %477 = vmatpush.msra.mxu0 %v476
      %v478 = vand.u32 %v421, 4294901760
      %v479 = vsub.f32 %v421, %v478
      %v480 = vand.u32 %v479, 4294901760
      %v481 = vsub.f32 %v479, %v480
      %v482 = vand.u32 %v481, 4294901760
      %483 = vmatpush.msra.mxu0 %v482
      %v484 = vand.u32 %v420, 4294901760
      %v485 = vsub.f32 %v420, %v484
      %v486 = vand.u32 %v485, 4294901760
      %v487 = vsub.f32 %v485, %v486
      %v488 = vand.u32 %v487, 4294901760
      %489 = vmatpush.msra.mxu0 %v488
      %v490 = vand.u32 %v419, 4294901760
      %v491 = vsub.f32 %v419, %v490
      %v492 = vand.u32 %v491, 4294901760
      %v493 = vsub.f32 %v491, %v492
      %v494 = vand.u32 %v493, 4294901760
      %495 = vmatpush.msra.mxu0 %v494
      %v496 = vand.u32 %v429, 4294901760
      %497 = vmatmul.f32.gmra.mxu0 %v496
      %v498 = vpop.f32.mrf.mxu0
      %v499 = vadd.f32 %v458, %v498
      %500 = vdwg.mxu0
      %501 = vmatpush.msra.mxu0 0.0
      %502 = vmatpush.msra.mxu0 0.0
      %503 = vmatpush.msra.mxu0 0.0
      %504 = vmatpush.msra.mxu0 0.0
      %505 = vmatpush.msra.mxu0 0.0
      %506 = vmatpush.msra.mxu0 0.0
      %507 = vmatpush.msra.mxu0 0.0
      %508 = vmatpush.msra.mxu0 0.0
      %509 = vmatpush.msra.mxu0 0.0
      %510 = vmatpush.msra.mxu0 0.0
      %511 = vmatpush.msra.mxu0 0.0
      %512 = vmatpush.msra.mxu0 0.0
      %v513 = vand.u32 %v422, 4294901760
      %v514 = vsub.f32 %v422, %v513
      %515 = vmatpush.msra.mxu0 %v514
      %v516 = vand.u32 %v421, 4294901760
      %v517 = vsub.f32 %v421, %v516
      %518 = vmatpush.msra.mxu0 %v517
      %v519 = vand.u32 %v420, 4294901760
      %v520 = vsub.f32 %v420, %v519
      %521 = vmatpush.msra.mxu0 %v520
      %v522 = vand.u32 %v419, 4294901760
      %v523 = vsub.f32 %v419, %v522
      %524 = vmatpush.msra.mxu0 %v523
      %v525 = vand.u32 %v429, 4294901760
      %v526 = vsub.f32 %v429, %v525
      %527 = vmatmul.f32.gmra.mxu0 %v526
      %v528 = vpop.f32.mrf.mxu0
      %v529 = vadd.f32 %v499, %v528
      %530 = vdwg.mxu0
      %531 = vmatpush.msra.mxu0 0.0
      %532 = vmatpush.msra.mxu0 0.0
      %533 = vmatpush.msra.mxu0 0.0
      %534 = vmatpush.msra.mxu0 0.0
      %535 = vmatpush.msra.mxu0 0.0
      %536 = vmatpush.msra.mxu0 0.0
      %537 = vmatpush.msra.mxu0 0.0
      %538 = vmatpush.msra.mxu0 0.0
      %539 = vmatpush.msra.mxu0 0.0
      %540 = vmatpush.msra.mxu0 0.0
      %541 = vmatpush.msra.mxu0 0.0
      %542 = vmatpush.msra.mxu0 0.0
      %v543 = vand.u32 %v422, 4294901760
      %544 = vmatpush.msra.mxu0 %v543
      %v545 = vand.u32 %v421, 4294901760
      %546 = vmatpush.msra.mxu0 %v545
      %v547 = vand.u32 %v420, 4294901760
      %548 = vmatpush.msra.mxu0 %v547
      %v549 = vand.u32 %v419, 4294901760
      %550 = vmatpush.msra.mxu0 %v549
      %v551 = vand.u32 %v429, 4294901760
      %v552 = vsub.f32 %v429, %v551
      %v553 = vand.u32 %v552, 4294901760
      %554 = vmatmul.f32.gmra.mxu0 %v553
      %v555 = vpop.f32.mrf.mxu0
      %v556 = vadd.f32 %v529, %v555
      %557 = vdwg.mxu0
      %558 = vmatpush.msra.mxu0 0.0
      %559 = vmatpush.msra.mxu0 0.0
      %560 = vmatpush.msra.mxu0 0.0
      %561 = vmatpush.msra.mxu0 0.0
      %562 = vmatpush.msra.mxu0 0.0
      %563 = vmatpush.msra.mxu0 0.0
      %564 = vmatpush.msra.mxu0 0.0
      %565 = vmatpush.msra.mxu0 0.0
      %566 = vmatpush.msra.mxu0 0.0
      %567 = vmatpush.msra.mxu0 0.0
      %568 = vmatpush.msra.mxu0 0.0
      %569 = vmatpush.msra.mxu0 0.0
      %v570 = vand.u32 %v422, 4294901760
      %v571 = vsub.f32 %v422, %v570
      %v572 = vand.u32 %v571, 4294901760
      %573 = vmatpush.msra.mxu0 %v572
      %v574 = vand.u32 %v421, 4294901760
      %v575 = vsub.f32 %v421, %v574
      %v576 = vand.u32 %v575, 4294901760
      %577 = vmatpush.msra.mxu0 %v576
      %v578 = vand.u32 %v420, 4294901760
      %v579 = vsub.f32 %v420, %v578
      %v580 = vand.u32 %v579, 4294901760
      %581 = vmatpush.msra.mxu0 %v580
      %v582 = vand.u32 %v419, 4294901760
      %v583 = vsub.f32 %v419, %v582
      %v584 = vand.u32 %v583, 4294901760
      %585 = vmatpush.msra.mxu0 %v584
      %v586 = vand.u32 %v429, 4294901760
      %587 = vmatmul.f32.gmra.mxu0 %v586
      %v588 = vpop.f32.mrf.mxu0
      %v589 = vadd.f32 %v556, %v588
      %590 = vdwg.mxu0
      %591 = vmatpush.msra.mxu0 0.0
      %592 = vmatpush.msra.mxu0 0.0
      %593 = vmatpush.msra.mxu0 0.0
      %594 = vmatpush.msra.mxu0 0.0
      %595 = vmatpush.msra.mxu0 0.0
      %596 = vmatpush.msra.mxu0 0.0
      %597 = vmatpush.msra.mxu0 0.0
      %598 = vmatpush.msra.mxu0 0.0
      %599 = vmatpush.msra.mxu0 0.0
      %600 = vmatpush.msra.mxu0 0.0
      %601 = vmatpush.msra.mxu0 0.0
      %602 = vmatpush.msra.mxu0 0.0
      %v603 = vand.u32 %v422, 4294901760
      %604 = vmatpush.msra.mxu0 %v603
      %v605 = vand.u32 %v421, 4294901760
      %606 = vmatpush.msra.mxu0 %v605
      %v607 = vand.u32 %v420, 4294901760
      %608 = vmatpush.msra.mxu0 %v607
      %v609 = vand.u32 %v419, 4294901760
      %610 = vmatpush.msra.mxu0 %v609
      %v611 = vand.u32 %v429, 4294901760
      %612 = vmatmul.f32.gmra.mxu0 %v611
      %v613 = vpop.f32.mrf.mxu0
      %v614 = vadd.f32 %v589, %v613
      %615 = vdwg.mxu0
      %v616 = vmax.f32 %v614, 0.0
      %v617 = vld [vmem:[%s5] sm:$0x1]
      %s618 = sld [smem:[#allocation3]]
      %v619 = vstv %s618
      %v621 = vsel %vm427, %v617, 0
      %v624 = vsel %vm427, %v616, 0
      %626 = vmatpush.xpose.msra.mxu0 0.0
      %627 = vmatpush.xpose.msra.mxu0 0.0
      %628 = vmatpush.xpose.msra.mxu0 0.0
      %629 = vmatpush.xpose.msra.mxu0 0.0
      %630 = vmatpush.xpose.msra.mxu0 0.0
      %631 = vmatpush.xpose.msra.mxu0 0.0
      %632 = vmatpush.xpose.msra.mxu0 0.0
      %633 = vmatpush.xpose.msra.mxu0 0.0
      %634 = vmatpush.xpose.msra.mxu0 0.0
      %635 = vmatpush.xpose.msra.mxu0 0.0
      %636 = vmatpush.xpose.msra.mxu0 0.0
      %637 = vmatpush.xpose.msra.mxu0 0.0
      %638 = vmatpush.xpose.msra.mxu0 0.0
      %639 = vmatpush.xpose.msra.mxu0 0.0
      %640 = vmatpush.xpose.msra.mxu0 0.0
      %v641 = vand.u32 %v624, 4294901760
      %642 = vmatpush.xpose.msra.mxu0 %v641
      %v643 = vand.u32 %v621, 4294901760
      %v644 = vsub.f32 %v621, %v643
      %v645 = vand.u32 %v644, 4294901760
      %v646 = vsub.f32 %v644, %v645
      %v647 = vand.u32 %v646, 4294901760
      %648 = vmatmul.f32.gmra.mxu0 %v647
      %v649 = vpop.f32.mrf.mxu0
      %v650 = vadd.f32 %v619, %v649
      %651 = vdwg.mxu0
      %652 = vmatpush.xpose.msra.mxu0 0.0
      %653 = vmatpush.xpose.msra.mxu0 0.0
      %654 = vmatpush.xpose.msra.mxu0 0.0
      %655 = vmatpush.xpose.msra.mxu0 0.0
      %656 = vmatpush.xpose.msra.mxu0 0.0
      %657 = vmatpush.xpose.msra.mxu0 0.0
      %658 = vmatpush.xpose.msra.mxu0 0.0
      %659 = vmatpush.xpose.msra.mxu0 0.0
      %660 = vmatpush.xpose.msra.mxu0 0.0
      %661 = vmatpush.xpose.msra.mxu0 0.0
      %662 = vmatpush.xpose.msra.mxu0 0.0
      %663 = vmatpush.xpose.msra.mxu0 0.0
      %664 = vmatpush.xpose.msra.mxu0 0.0
      %665 = vmatpush.xpose.msra.mxu0 0.0
      %666 = vmatpush.xpose.msra.mxu0 0.0
      %v667 = vand.u32 %v624, 4294901760
      %v668 = vsub.f32 %v624, %v667
      %v669 = vand.u32 %v668, 4294901760
      %v670 = vsub.f32 %v668, %v669
      %v671 = vand.u32 %v670, 4294901760
      %672 = vmatpush.xpose.msra.mxu0 %v671
      %v673 = vand.u32 %v621, 4294901760
      %674 = vmatmul.f32.gmra.mxu0 %v673
      %v675 = vpop.f32.mrf.mxu0
      %v676 = vadd.f32 %v650, %v675
      %677 = vdwg.mxu0
      %678 = vmatpush.xpose.msra.mxu0 0.0
      %679 = vmatpush.xpose.msra.mxu0 0.0
      %680 = vmatpush.xpose.msra.mxu0 0.0
      %681 = vmatpush.xpose.msra.mxu0 0.0
      %682 = vmatpush.xpose.msra.mxu0 0.0
      %683 = vmatpush.xpose.msra.mxu0 0.0
      %684 = vmatpush.xpose.msra.mxu0 0.0
      %685 = vmatpush.xpose.msra.mxu0 0.0
      %686 = vmatpush.xpose.msra.mxu0 0.0
      %687 = vmatpush.xpose.msra.mxu0 0.0
      %688 = vmatpush.xpose.msra.mxu0 0.0
      %689 = vmatpush.xpose.msra.mxu0 0.0
      %690 = vmatpush.xpose.msra.mxu0 0.0
      %691 = vmatpush.xpose.msra.mxu0 0.0
      %692 = vmatpush.xpose.msra.mxu0 0.0
      %v693 = vand.u32 %v624, 4294901760
      %v694 = vsub.f32 %v624, %v693
      %695 = vmatpush.xpose.msra.mxu0 %v694
      %v696 = vand.u32 %v621, 4294901760
      %v697 = vsub.f32 %v621, %v696
      %698 = vmatmul.f32.gmra.mxu0 %v697
      %v699 = vpop.f32.mrf.mxu0
      %v700 = vadd.f32 %v676, %v699
      %701 = vdwg.mxu0
      %702 = vmatpush.xpose.msra.mxu0 0.0
      %703 = vmatpush.xpose.msra.mxu0 0.0
      %704 = vmatpush.xpose.msra.mxu0 0.0
      %705 = vmatpush.xpose.msra.mxu0 0.0
      %706 = vmatpush.xpose.msra.mxu0 0.0
      %707 = vmatpush.xpose.msra.mxu0 0.0
      %708 = vmatpush.xpose.msra.mxu0 0.0
      %709 = vmatpush.xpose.msra.mxu0 0.0
      %710 = vmatpush.xpose.msra.mxu0 0.0
      %711 = vmatpush.xpose.msra.mxu0 0.0
      %712 = vmatpush.xpose.msra.mxu0 0.0
      %713 = vmatpush.xpose.msra.mxu0 0.0
      %714 = vmatpush.xpose.msra.mxu0 0.0
      %715 = vmatpush.xpose.msra.mxu0 0.0
      %716 = vmatpush.xpose.msra.mxu0 0.0
      %v717 = vand.u32 %v624, 4294901760
      %718 = vmatpush.xpose.msra.mxu0 %v717
      %v719 = vand.u32 %v621, 4294901760
      %v720 = vsub.f32 %v621, %v719
      %v721 = vand.u32 %v720, 4294901760
      %722 = vmatmul.f32.gmra.mxu0 %v721
      %v723 = vpop.f32.mrf.mxu0
      %v724 = vadd.f32 %v700, %v723
      %725 = vdwg.mxu0
      %726 = vmatpush.xpose.msra.mxu0 0.0
      %727 = vmatpush.xpose.msra.mxu0 0.0
      %728 = vmatpush.xpose.msra.mxu0 0.0
      %729 = vmatpush.xpose.msra.mxu0 0.0
      %730 = vmatpush.xpose.msra.mxu0 0.0
      %731 = vmatpush.xpose.msra.mxu0 0.0
      %732 = vmatpush.xpose.msra.mxu0 0.0
      %733 = vmatpush.xpose.msra.mxu0 0.0
      %734 = vmatpush.xpose.msra.mxu0 0.0
      %735 = vmatpush.xpose.msra.mxu0 0.0
      %736 = vmatpush.xpose.msra.mxu0 0.0
      %737 = vmatpush.xpose.msra.mxu0 0.0
      %738 = vmatpush.xpose.msra.mxu0 0.0
      %739 = vmatpush.xpose.msra.mxu0 0.0
      %740 = vmatpush.xpose.msra.mxu0 0.0
      %v741 = vand.u32 %v624, 4294901760
      %v742 = vsub.f32 %v624, %v741
      %v743 = vand.u32 %v742, 4294901760
      %744 = vmatpush.xpose.msra.mxu0 %v743
      %v745 = vand.u32 %v621, 4294901760
      %746 = vmatmul.f32.gmra.mxu0 %v745
      %v747 = vpop.f32.mrf.mxu0
      %v748 = vadd.f32 %v724, %v747
      %749 = vdwg.mxu0
      %750 = vmatpush.xpose.msra.mxu0 0.0
      %751 = vmatpush.xpose.msra.mxu0 0.0
      %752 = vmatpush.xpose.msra.mxu0 0.0
      %753 = vmatpush.xpose.msra.mxu0 0.0
      %754 = vmatpush.xpose.msra.mxu0 0.0
      %755 = vmatpush.xpose.msra.mxu0 0.0
      %756 = vmatpush.xpose.msra.mxu0 0.0
      %757 = vmatpush.xpose.msra.mxu0 0.0
      %758 = vmatpush.xpose.msra.mxu0 0.0
      %759 = vmatpush.xpose.msra.mxu0 0.0
      %760 = vmatpush.xpose.msra.mxu0 0.0
      %761 = vmatpush.xpose.msra.mxu0 0.0
      %762 = vmatpush.xpose.msra.mxu0 0.0
      %763 = vmatpush.xpose.msra.mxu0 0.0
      %764 = vmatpush.xpose.msra.mxu0 0.0
      %v765 = vand.u32 %v624, 4294901760
      %766 = vmatpush.xpose.msra.mxu0 %v765
      %v767 = vand.u32 %v621, 4294901760
      %768 = vmatmul.f32.gmra.mxu0 %v767
      %v769 = vpop.f32.mrf.mxu0
      %v770 = vadd.f32 %v748, %v769
      %771 = vdwg.mxu0
      %vm772 = vcmask 24576
      %773 = vst.msk [vmem:[#allocation12] sm:$0x1] %vm772, %v770
    $region53: #{tpu_custom_call.1} parent=1 // pred_fallthru
      _
    // Predicated region
    $region54: #{tpu_custom_call.1} parent=1 // pred_check
      _
    $region55: #{tpu_custom_call.1} parent=1 // pred_check_branch
      %775 = sbr.rel (0) target = $region57
    $region56: #{tpu_custom_call.1} parent=1 // pred_region
      %777 = vsyncadd [#allocation6], 0
      %s779 = sshll.u32 [#allocation12], 4
      %s780 = int_to_ptr.vmem [resolvable:$true] %s779
      %s781 = sshll.u32 %s7, 4
      %s782 = int_to_ptr.hbm [resolvable:$true] %s781
      %784 = dma.vmem_to_hbm [thread:$0]  %s780, 16, %s782, [#allocation6]
    $region57: #{tpu_custom_call.1} parent=1 // pred_fallthru
      _
    // Predicated region
    $region58: #{tpu_custom_call.1} parent=1 // pred_check
      _
    $region59: #{tpu_custom_call.1} parent=1 // pred_check_branch
      %786 = sbr.rel (0) target = $region61
    $region60: #{tpu_custom_call.1} parent=1 // pred_region
      %788 = dma.done [#allocation6], 16
    $region61: #{tpu_custom_call.1} parent=1 // pred_fallthru
      _
    %789 = vsyncpa [#allocation5], 1
    %790 = vsyncpa [#allocation8], 1
    %791 = vsyncpa [#allocation11], 1
    %792 = vsyncpa [#allocation6], 1

</llo_original>
